<compile_context>
chip_gen: v7x
topology: tpu7x:2x2x1
jax: 0.10.0
libtpu: 0.0.40
codegen_flags: <defaults>
</compile_context>

<pallas_src>
import jax
import jax.numpy as jnp
from jax import lax
from jax.experimental import pallas as pl
from jax.experimental.pallas import tpu as pltpu

C_IN = 13    # fc1 input features
C_OUT = 32   # fc1 output features == BatchNorm1d channels
EPS = 1e-5   # PyTorch BatchNorm1d default eps


def mlp1a_kernel(x_ref, wt_ref, gb_ref, o_ref):
    x = x_ref[...]            # (M, 13)   M = N * L rows
    wt = wt_ref[...]          # (13, 32)  pre-transposed weight (K, N) layout
    gamma = gb_ref[0:1, :]    # (1, 32)
    beta = gb_ref[1:2, :]     # (1, 32)

    # fc1 (bias omitted: a per-channel constant is exactly removed by the
    # training-mode batch-mean subtraction below).  Canonical (M,K)x(K,N)
    # contraction -> MXU directly, no rhs transpose.
    y = jnp.dot(x, wt, preferred_element_type=jnp.float32)   # (M, 32)

    # bn1: training-mode BatchNorm1d — stats over all N*L rows, per channel.
    # One-pass form: the two sublane reductions are independent.
    # NOTE: y.shape[0] is the global row count only because this call is
    # gridless with the full array resident; a future grid over M must
    # accumulate sums across steps and divide by the global M.
    inv_m = jnp.float32(1.0 / y.shape[0])
    sum_y = jnp.sum(y, axis=0, keepdims=True)                # (1, 32)
    sum_y2 = jnp.sum(y * y, axis=0, keepdims=True)           # (1, 32)
    mean = sum_y * inv_m
    var = sum_y2 * inv_m - mean * mean                       # biased variance
    inv_std = lax.rsqrt(var + EPS)                           # EUP slot

    # Fold BN into a single scale/shift, then ReLU.
    scale = gamma * inv_std                                  # (1, 32)
    shift = beta - mean * scale                              # (1, 32)

    # TODO(synk): nn.Dropout(0.1) is stochastic; treated as identity here
    # (inference / forward_lrp semantics).
    o_ref[...] = jnp.maximum(y * scale + shift, 0.0)         # relu


def prepare_params(w, gamma, beta):
    """One-time static parameter prep (outside the jitted forward).

    w: (32, 13) PyTorch (out, in) layout -> returned as (13, 32).
    gamma, beta: (32,) -> packed into one (2, 32) buffer (single param DMA).
    """
    wt = jnp.asarray(w).T                      # (13, 32)
    gb = jnp.stack([gamma, beta], axis=0)      # (2, 32)
    return wt, gb


def mlp1a_forward(x, wt, gb):
    """x: (N, L, 13) f32. wt: (13, 32). gb: (2, 32). Returns (N, L, 32)."""
    n, l, _ = x.shape
    m = n * l
    x2 = x.reshape(m, C_IN)                    # pure reshape, no data movement

    cost = pl.CostEstimate(
        flops=2 * m * C_IN * C_OUT,
        bytes_accessed=4 * (m * C_IN + m * C_OUT + C_IN * C_OUT + 2 * C_OUT),
        transcendentals=C_OUT,                 # one rsqrt per channel
    )

    out2 = pl.pallas_call(
        mlp1a_kernel,
        out_shape=jax.ShapeDtypeStruct((m, C_OUT), jnp.float32),
        in_specs=[
            pl.BlockSpec(memory_space=pltpu.MemorySpace.VMEM),
            pl.BlockSpec(memory_space=pltpu.MemorySpace.VMEM),
            pl.BlockSpec(memory_space=pltpu.MemorySpace.VMEM),
        ],
        out_specs=pl.BlockSpec(memory_space=pltpu.MemorySpace.VMEM),
        cost_estimate=cost,
        compiler_params=pltpu.CompilerParams(
            # whole-array-resident design: tiny at this size, and explicit so
            # it stays inside v5e's 16 MiB scoped default and v7x's 64 MiB.
            vmem_limit_bytes=8 * 1024 * 1024,
        ),
    )(x2, wt, gb)
    return out2.reshape(n, l, C_OUT)


if __name__ == "__main__":
    key = jax.random.PRNGKey(0)
    kx, kw, kb = jax.random.split(key, 3)

    N, L = 4, 32          # input (N x L x C) with C = 13; M = N*L = 128 rows

    # PyTorch-style Linear init: U(-1/sqrt(in), 1/sqrt(in))
    bound = 1.0 / (C_IN ** 0.5)
    w = jax.random.uniform(kw, (C_OUT, C_IN), jnp.float32, -bound, bound)
    b = jax.random.uniform(kb, (C_OUT,), jnp.float32, -bound, bound)
    gamma = jnp.ones((C_OUT,), jnp.float32)   # BatchNorm1d default weight
    beta = jnp.zeros((C_OUT,), jnp.float32)   # BatchNorm1d default bias

    x = jax.random.normal(kx, (N, L, C_IN), jnp.float32)

    # One-time parameter prep (hoisted out of the per-call forward).
    wt, gb = prepare_params(w, gamma, beta)

    fwd = jax.jit(mlp1a_forward)
    out = fwd(x, wt, gb)
    jax.block_until_ready(out)

    # Reference in plain JAX with FULL module semantics (fc1 bias included) to
    # verify that dropping the bias inside the kernel is exact under
    # training-mode batch norm.
    y_ref = jnp.einsum("nlc,oc->nlo", x, w) + b                  # fc1
    m_ = y_ref.mean(axis=(0, 1), keepdims=True)                  # BN over N, L
    v_ = ((y_ref - m_) ** 2).mean(axis=(0, 1), keepdims=True)    # biased var
    ref = jnp.maximum(gamma * (y_ref - m_) / jnp.sqrt(v_ + EPS) + beta, 0.0)

    assert out.shape == (N, L, C_OUT)
    assert jnp.allclose(out, ref, atol=1e-4, rtol=1e-4), "mismatch vs reference"

    print("KERNEL_OK")
</pallas_src>

<mosaic_0001>
module attributes {stable_mosaic.version = 11 : i64} {
  func.func @mlp1a_kernel(%arg0: memref<128x13xf32, #tpu.memory_space<vmem>>, %arg1: memref<13x32xf32, #tpu.memory_space<vmem>>, %arg2: memref<2x32xf32, #tpu.memory_space<vmem>>, %arg3: memref<128x32xf32, #tpu.memory_space<vmem>>) attributes {dimension_semantics = [], scalar_prefetch = 0 : i64, scratch_operands = 0 : i64, tpu.core_type = #tpu.core_type<tc>} {
    %c0 = arith.constant 0 : index
    %c0_0 = arith.constant 0 : index
    %0 = vector.load %arg0[%c0, %c0_0] : memref<128x13xf32, #tpu.memory_space<vmem>>, vector<128x13xf32>
    %c0_1 = arith.constant 0 : index
    %c0_2 = arith.constant 0 : index
    %1 = vector.load %arg1[%c0_1, %c0_2] : memref<13x32xf32, #tpu.memory_space<vmem>>, vector<13x32xf32>
    %c0_3 = arith.constant 0 : index
    %c0_4 = arith.constant 0 : index
    %2 = vector.load %arg2[%c0_3, %c0_4] : memref<2x32xf32, #tpu.memory_space<vmem>>, vector<1x32xf32>
    %c1 = arith.constant 1 : index
    %c0_5 = arith.constant 0 : index
    %3 = vector.load %arg2[%c1, %c0_5] : memref<2x32xf32, #tpu.memory_space<vmem>>, vector<1x32xf32>
    %cst = arith.constant dense<0.000000e+00> : vector<128x32xf32>
    %4 = tpu.matmul %0, %1, %cst {dimension_numbers = #tpu.dot_dimension_numbers<[1], [0], [0], [1], [0, 0, 1, 1], [], []>} : vector<128x13xf32>, vector<13x32xf32>, vector<128x32xf32> -> vector<128x32xf32>
    %cst_6 = arith.constant dense<0.000000e+00> : vector<32xf32>
    %5 = vector.multi_reduction <add>, %4, %cst_6 [0] : vector<128x32xf32> to vector<32xf32>
    %6 = vector.shape_cast %5 : vector<32xf32> to vector<1x32xf32>
    %7 = arith.mulf %4, %4 : vector<128x32xf32>
    %cst_7 = arith.constant dense<0.000000e+00> : vector<32xf32>
    %8 = vector.multi_reduction <add>, %7, %cst_7 [0] : vector<128x32xf32> to vector<32xf32>
    %9 = vector.shape_cast %8 : vector<32xf32> to vector<1x32xf32>
    %cst_8 = arith.constant 7.812500e-03 : f32
    %10 = vector.broadcast %cst_8 : f32 to vector<1x32xf32>
    %11 = arith.mulf %6, %10 : vector<1x32xf32>
    %cst_9 = arith.constant 7.812500e-03 : f32
    %12 = vector.broadcast %cst_9 : f32 to vector<1x32xf32>
    %13 = arith.mulf %9, %12 : vector<1x32xf32>
    %14 = arith.mulf %11, %11 : vector<1x32xf32>
    %15 = arith.subf %13, %14 : vector<1x32xf32>
    %cst_10 = arith.constant 9.99999974E-6 : f32
    %16 = vector.broadcast %cst_10 : f32 to vector<1x32xf32>
    %17 = arith.addf %15, %16 : vector<1x32xf32>
    %18 = math.rsqrt %17 : vector<1x32xf32>
    %19 = arith.mulf %2, %18 : vector<1x32xf32>
    %20 = arith.mulf %11, %19 : vector<1x32xf32>
    %21 = arith.subf %3, %20 : vector<1x32xf32>
    %22 = vector.broadcast %19 : vector<1x32xf32> to vector<128x32xf32>
    %23 = arith.mulf %4, %22 : vector<128x32xf32>
    %24 = vector.broadcast %21 : vector<1x32xf32> to vector<128x32xf32>
    %25 = arith.addf %23, %24 : vector<128x32xf32>
    %cst_11 = arith.constant 0.000000e+00 : f32
    %26 = vector.broadcast %cst_11 : f32 to vector<128x32xf32>
    %27 = arith.maximumf %25, %26 : vector<128x32xf32>
    %c0_12 = arith.constant 0 : index
    %c0_13 = arith.constant 0 : index
    %28 = vector.load %arg3[%c0_12, %c0_13] : memref<128x32xf32, #tpu.memory_space<vmem>>, vector<128x32xf32>
    tpu.vector_store %arg3[%c0_12, %c0_13], %27 {strides = array<i32>} : memref<128x32xf32, #tpu.memory_space<vmem>>, vector<128x32xf32>,
    return
  }
}

</mosaic_0001>

<llo_original>
// kernel: mlp1a_forward.1
$region0: #{mlp1a_forward.1}
  #allocation0 [shape = 'u32[]', space=smem, size = 0x4, offset = 0x4, fixed_abs, tag = 'smem constant byte address 0x4 - core index']
  #allocation1 [shape = 'u32[144,128]{1,0:T(1,128)}', space=vmem, size = 0x12000, scoped, tag = 'internal scratch']
  %s0 = inlined_call_operand.vmem [shape: f32[128,13], index: 0, kind: input, shape index: {}]
  %s1 = inlined_call_operand.vmem [shape: f32[13,32], index: 1, kind: input, shape index: {}]
  %s2 = inlined_call_operand.vmem [shape: f32[2,32], index: 2, kind: input, shape index: {}]
  %s3 = inlined_call_operand.hbm [shape: f32[128,32], index: 3, kind: output, shape index: {}]
  %s4 = sld [smem:[#allocation0]]
  $region22: #{mlp1a_forward.1} parent=0
    _
  %s6 = ssub.s32 1, %s4
  %s7 = scalar_select 0, %s6, %s4
  $region1: #{mlp1a_forward.1} parent=0
    #allocation2 [shape = 'u8[65536]{0}', space=vmem, size = 0x10000, scoped, tag = 'output window, operand 0, single buffered']
    #allocation3 [shape = 's32[1]{0}', space=sflag, size = 0x4, scoped, tag = 'scoped memory for mlp1a_forward.1']
    %8 = vsyncpa [#allocation3], 0
    // Predicated region
    $region2: #{mlp1a_forward.1} parent=1 // pred_check
      _
    $region3: #{mlp1a_forward.1} parent=1 // pred_check_branch
      %10 = sbr.rel (0) target = $region5
    $region4: #{mlp1a_forward.1} parent=1 // pred_region
      _
    $region5: #{mlp1a_forward.1} parent=1 // pred_fallthru
      _
    // Predicated region
    $region6: #{mlp1a_forward.1} parent=1 // pred_check
      _
    $region7: #{mlp1a_forward.1} parent=1 // pred_check_branch
      %12 = sbr.rel (0) target = $region9
    $region8: #{mlp1a_forward.1} parent=1 // pred_region
      _
    $region9: #{mlp1a_forward.1} parent=1 // pred_fallthru
      _
    // Predicated region
    $region10: #{mlp1a_forward.1} parent=1 // pred_check
      _
    $region11: #{mlp1a_forward.1} parent=1 // pred_check_branch
      %14 = sbr.rel (0) target = $region13
    $region12: #{mlp1a_forward.1} parent=1 // pred_region
      _
    $region13: #{mlp1a_forward.1} parent=1 // pred_fallthru
      _
    %v15 = vld [vmem:[%s0] sm:$0xff]
    %v16 = vld [vmem:[%s0 + $0x8] sm:$0xff]
    %v17 = vld [vmem:[%s0 + $0x10] sm:$0xff]
    %v18 = vld [vmem:[%s0 + $0x18] sm:$0xff]
    %v19 = vld [vmem:[%s0 + $0x20] sm:$0xff]
    %v20 = vld [vmem:[%s0 + $0x28] sm:$0xff]
    %v21 = vld [vmem:[%s0 + $0x30] sm:$0xff]
    %v22 = vld [vmem:[%s0 + $0x38] sm:$0xff]
    %v23 = vld [vmem:[%s0 + $0x40] sm:$0xff]
    %v24 = vld [vmem:[%s0 + $0x48] sm:$0xff]
    %v25 = vld [vmem:[%s0 + $0x50] sm:$0xff]
    %v26 = vld [vmem:[%s0 + $0x58] sm:$0xff]
    %v27 = vld [vmem:[%s0 + $0x60] sm:$0xff]
    %v28 = vld [vmem:[%s0 + $0x68] sm:$0xff]
    %v29 = vld [vmem:[%s0 + $0x70] sm:$0xff]
    %v30 = vld [vmem:[%s0 + $0x78] sm:$0xff]
    %v31 = vld [vmem:[%s1] sm:$0xff]
    %v32 = vld [vmem:[%s1 + $0x8] sm:$0x1f]
    %v33 = vld [vmem:[%s2] sm:$0x1]
    %v34 = vld [vmem:[%s2 + $0x1] sm:$0x1]
    %vm35 = vcmask 105472
    %v37 = vsel %vm35, %v15, 0
    %v40 = vsel %vm35, %v16, 0
    %v43 = vsel %vm35, %v17, 0
    %v46 = vsel %vm35, %v18, 0
    %v49 = vsel %vm35, %v19, 0
    %v52 = vsel %vm35, %v20, 0
    %v55 = vsel %vm35, %v21, 0
    %v58 = vsel %vm35, %v22, 0
    %v61 = vsel %vm35, %v23, 0
    %v64 = vsel %vm35, %v24, 0
    %v67 = vsel %vm35, %v25, 0
    %v70 = vsel %vm35, %v26, 0
    %v73 = vsel %vm35, %v27, 0
    %v76 = vsel %vm35, %v28, 0
    %v79 = vsel %vm35, %v29, 0
    %v82 = vsel %vm35, %v30, 0
    %vm84 = vcmask 1044480
    %v86 = vsel %vm84, %v32, 0
    %88 = vmatprep.subr.mxu0 0.0
    %89 = vmatpush1.msra.mxu0 %v31
    %90 = vmatprep.subr.mxu0 0.0
    %91 = vmatpush1.msra.mxu0 %v86
    %92 = vmatprep.subr.mxu0 0.0
    %93 = vmatpush1.msra.mxu0 0.0
    %94 = vmatprep.subr.mxu0 0.0
    %95 = vmatpush1.msra.mxu0 0.0
    %96 = vmatprep.subr.mxu0 0.0
    %97 = vmatpush1.msra.mxu0 0.0
    %98 = vmatprep.subr.mxu0 0.0
    %99 = vmatpush1.msra.mxu0 0.0
    %100 = vmatprep.subr.mxu0 0.0
    %101 = vmatpush1.msra.mxu0 0.0
    %102 = vmatprep.subr.mxu0 0.0
    %103 = vmatpush1.msra.mxu0 0.0
    %104 = vmatprep.subr.mxu0 0.0
    %105 = vmatpush1.msra.mxu0 0.0
    %106 = vmatprep.subr.mxu0 0.0
    %107 = vmatpush1.msra.mxu0 0.0
    %108 = vmatprep.subr.mxu0 0.0
    %109 = vmatpush1.msra.mxu0 0.0
    %110 = vmatprep.subr.mxu0 0.0
    %111 = vmatpush1.msra.mxu0 0.0
    %112 = vmatprep.subr.mxu0 0.0
    %113 = vmatpush1.msra.mxu0 0.0
    %114 = vmatprep.subr.mxu0 0.0
    %115 = vmatpush1.msra.mxu0 0.0
    %116 = vmatprep.subr.mxu0 0.0
    %117 = vmatpush1.msra.mxu0 0.0
    %118 = vmatprep.subr.mxu0 0.0
    %119 = vmatpush1.msra.mxu0 0.0
    %120 = vmatprep.subr.mxu0 0.0
    %121 = vmatpush1.msra.mxu0 0.0
    %122 = vmatprep.subr.mxu0 0.0
    %123 = vmatpush1.msra.mxu0 0.0
    %124 = vmatprep.subr.mxu0 0.0
    %125 = vmatpush1.msra.mxu0 0.0
    %126 = vmatprep.subr.mxu0 0.0
    %127 = vmatpush1.msra.mxu0 0.0
    %128 = vmatprep.subr.mxu0 0.0
    %129 = vmatpush1.msra.mxu0 0.0
    %130 = vmatprep.subr.mxu0 0.0
    %131 = vmatpush1.msra.mxu0 0.0
    %132 = vmatprep.subr.mxu0 0.0
    %133 = vmatpush1.msra.mxu0 0.0
    %134 = vmatprep.subr.mxu0 0.0
    %135 = vmatpush1.msra.mxu0 0.0
    %136 = vmatprep.subr.mxu0 0.0
    %137 = vmatpush1.msra.mxu0 0.0
    %138 = vmatprep.subr.mxu0 0.0
    %139 = vmatpush1.msra.mxu0 0.0
    %140 = vmatprep.subr.mxu0 0.0
    %141 = vmatpush1.msra.mxu0 0.0
    %142 = vmatprep.subr.mxu0 0.0
    %143 = vmatpush1.msra.mxu0 0.0
    %144 = vmatprep.subr.mxu0 0.0
    %145 = vmatpush1.msra.mxu0 0.0
    %146 = vmatprep.subr.mxu0 0.0
    %147 = vmatpush1.msra.mxu0 0.0
    %148 = vmatprep.subr.mxu0 0.0
    %149 = vmatpush1.msra.mxu0 0.0
    %150 = vmatprep.subr.mxu0 0.0
    %151 = vmatpush1.msra.mxu0 0.0
    %152 = vmatprep.mubr.f32.mxu0 0.0
    %153 = vmatmul.mubr.f32.gmra.mrb[0].mxu0 %v37
    %v154 = vpop.f32.mrb[0].mxu0
    %v155 = vadd.f32 0.0, %v154
    %v156 = vpop.f32.mrb[0].mxu0
    %157 = vmatprep.mubr.f32.mxu0 0.0
    %158 = vmatmul.mubr.f32.gmra.mrb[0].mxu0 %v40
    %v159 = vpop.f32.mrb[0].mxu0
    %v160 = vadd.f32 0.0, %v159
    %v161 = vpop.f32.mrb[0].mxu0
    %162 = vmatprep.mubr.f32.mxu0 0.0
    %163 = vmatmul.mubr.f32.gmra.mrb[0].mxu0 %v43
    %v164 = vpop.f32.mrb[0].mxu0
    %v165 = vadd.f32 0.0, %v164
    %v166 = vpop.f32.mrb[0].mxu0
    %167 = vmatprep.mubr.f32.mxu0 0.0
    %168 = vmatmul.mubr.f32.gmra.mrb[0].mxu0 %v46
    %v169 = vpop.f32.mrb[0].mxu0
    %v170 = vadd.f32 0.0, %v169
    %v171 = vpop.f32.mrb[0].mxu0
    %172 = vmatprep.mubr.f32.mxu0 0.0
    %173 = vmatmul.mubr.f32.gmra.mrb[0].mxu0 %v49
    %v174 = vpop.f32.mrb[0].mxu0
    %v175 = vadd.f32 0.0, %v174
    %v176 = vpop.f32.mrb[0].mxu0
    %177 = vmatprep.mubr.f32.mxu0 0.0
    %178 = vmatmul.mubr.f32.gmra.mrb[0].mxu0 %v52
    %v179 = vpop.f32.mrb[0].mxu0
    %v180 = vadd.f32 0.0, %v179
    %v181 = vpop.f32.mrb[0].mxu0
    %182 = vmatprep.mubr.f32.mxu0 0.0
    %183 = vmatmul.mubr.f32.gmra.mrb[0].mxu0 %v55
    %v184 = vpop.f32.mrb[0].mxu0
    %v185 = vadd.f32 0.0, %v184
    %v186 = vpop.f32.mrb[0].mxu0
    %187 = vmatprep.mubr.f32.mxu0 0.0
    %188 = vmatmul.mubr.f32.gmra.mrb[0].mxu0 %v58
    %v189 = vpop.f32.mrb[0].mxu0
    %v190 = vadd.f32 0.0, %v189
    %v191 = vpop.f32.mrb[0].mxu0
    %192 = vmatprep.mubr.f32.mxu0 0.0
    %193 = vmatmul.mubr.f32.gmra.mrb[0].mxu0 %v61
    %v194 = vpop.f32.mrb[0].mxu0
    %v195 = vadd.f32 0.0, %v194
    %v196 = vpop.f32.mrb[0].mxu0
    %197 = vmatprep.mubr.f32.mxu0 0.0
    %198 = vmatmul.mubr.f32.gmra.mrb[0].mxu0 %v64
    %v199 = vpop.f32.mrb[0].mxu0
    %v200 = vadd.f32 0.0, %v199
    %v201 = vpop.f32.mrb[0].mxu0
    %202 = vmatprep.mubr.f32.mxu0 0.0
    %203 = vmatmul.mubr.f32.gmra.mrb[0].mxu0 %v67
    %v204 = vpop.f32.mrb[0].mxu0
    %v205 = vadd.f32 0.0, %v204
    %v206 = vpop.f32.mrb[0].mxu0
    %207 = vmatprep.mubr.f32.mxu0 0.0
    %208 = vmatmul.mubr.f32.gmra.mrb[0].mxu0 %v70
    %v209 = vpop.f32.mrb[0].mxu0
    %v210 = vadd.f32 0.0, %v209
    %v211 = vpop.f32.mrb[0].mxu0
    %212 = vmatprep.mubr.f32.mxu0 0.0
    %213 = vmatmul.mubr.f32.gmra.mrb[0].mxu0 %v73
    %v214 = vpop.f32.mrb[0].mxu0
    %v215 = vadd.f32 0.0, %v214
    %v216 = vpop.f32.mrb[0].mxu0
    %217 = vmatprep.mubr.f32.mxu0 0.0
    %218 = vmatmul.mubr.f32.gmra.mrb[0].mxu0 %v76
    %v219 = vpop.f32.mrb[0].mxu0
    %v220 = vadd.f32 0.0, %v219
    %v221 = vpop.f32.mrb[0].mxu0
    %222 = vmatprep.mubr.f32.mxu0 0.0
    %223 = vmatmul.mubr.f32.gmra.mrb[0].mxu0 %v79
    %v224 = vpop.f32.mrb[0].mxu0
    %v225 = vadd.f32 0.0, %v224
    %v226 = vpop.f32.mrb[0].mxu0
    %227 = vmatprep.mubr.f32.mxu0 0.0
    %228 = vmatmul.mubr.f32.gmra.mrb[0].mxu0 %v82
    %v229 = vpop.f32.mrb[0].mxu0
    %v230 = vadd.f32 0.0, %v229
    %v231 = vpop.f32.mrb[0].mxu0
    %232 = vdwg.mxu0
    %vm233 = vcmask 261120
    %v234 = vsel %vm233, %v155, 0.0
    %v235 = vsel %vm233, %v160, 0.0
    %v236 = vadd.f32 %v234, %v235
    %v237 = vsel %vm233, %v165, 0.0
    %v238 = vadd.f32 %v236, %v237
    %v239 = vsel %vm233, %v170, 0.0
    %v240 = vadd.f32 %v238, %v239
    %v241 = vsel %vm233, %v175, 0.0
    %v242 = vadd.f32 %v240, %v241
    %v243 = vsel %vm233, %v180, 0.0
    %v244 = vadd.f32 %v242, %v243
    %v245 = vsel %vm233, %v185, 0.0
    %v246 = vadd.f32 %v244, %v245
    %v247 = vsel %vm233, %v190, 0.0
    %v248 = vadd.f32 %v246, %v247
    %v249 = vsel %vm233, %v195, 0.0
    %v250 = vadd.f32 %v248, %v249
    %v251 = vsel %vm233, %v200, 0.0
    %v252 = vadd.f32 %v250, %v251
    %v253 = vsel %vm233, %v205, 0.0
    %v254 = vadd.f32 %v252, %v253
    %v255 = vsel %vm233, %v210, 0.0
    %v256 = vadd.f32 %v254, %v255
    %v257 = vsel %vm233, %v215, 0.0
    %v258 = vadd.f32 %v256, %v257
    %v259 = vsel %vm233, %v220, 0.0
    %v260 = vadd.f32 %v258, %v259
    %v261 = vsel %vm233, %v225, 0.0
    %v262 = vadd.f32 %v260, %v261
    %v263 = vsel %vm233, %v230, 0.0
    %v264 = vadd.f32 %v262, %v263
    %v265 = vrot.slane %v264, 4
    %v266 = vadd.f32 %v264, %v265
    %v267 = vrot.slane %v266, 2
    %v268 = vadd.f32 %v266, %v267
    %v269 = vrot.slane %v268, 1
    %v270 = vadd.f32 %v268, %v269
    %v271 = vmul.f32 %v155, %v155
    %v272 = vmul.f32 %v160, %v160
    %v273 = vmul.f32 %v165, %v165
    %v274 = vmul.f32 %v170, %v170
    %v275 = vmul.f32 %v175, %v175
    %v276 = vmul.f32 %v180, %v180
    %v277 = vmul.f32 %v185, %v185
    %v278 = vmul.f32 %v190, %v190
    %v279 = vmul.f32 %v195, %v195
    %v280 = vmul.f32 %v200, %v200
    %v281 = vmul.f32 %v205, %v205
    %v282 = vmul.f32 %v210, %v210
    %v283 = vmul.f32 %v215, %v215
    %v284 = vmul.f32 %v220, %v220
    %v285 = vmul.f32 %v225, %v225
    %v286 = vmul.f32 %v230, %v230
    %v287 = vsel %vm233, %v271, 0.0
    %v288 = vsel %vm233, %v272, 0.0
    %v289 = vadd.f32 %v287, %v288
    %v290 = vsel %vm233, %v273, 0.0
    %v291 = vadd.f32 %v289, %v290
    %v292 = vsel %vm233, %v274, 0.0
    %v293 = vadd.f32 %v291, %v292
    %v294 = vsel %vm233, %v275, 0.0
    %v295 = vadd.f32 %v293, %v294
    %v296 = vsel %vm233, %v276, 0.0
    %v297 = vadd.f32 %v295, %v296
    %v298 = vsel %vm233, %v277, 0.0
    %v299 = vadd.f32 %v297, %v298
    %v300 = vsel %vm233, %v278, 0.0
    %v301 = vadd.f32 %v299, %v300
    %v302 = vsel %vm233, %v279, 0.0
    %v303 = vadd.f32 %v301, %v302
    %v304 = vsel %vm233, %v280, 0.0
    %v305 = vadd.f32 %v303, %v304
    %v306 = vsel %vm233, %v281, 0.0
    %v307 = vadd.f32 %v305, %v306
    %v308 = vsel %vm233, %v282, 0.0
    %v309 = vadd.f32 %v307, %v308
    %v310 = vsel %vm233, %v283, 0.0
    %v311 = vadd.f32 %v309, %v310
    %v312 = vsel %vm233, %v284, 0.0
    %v313 = vadd.f32 %v311, %v312
    %v314 = vsel %vm233, %v285, 0.0
    %v315 = vadd.f32 %v313, %v314
    %v316 = vsel %vm233, %v286, 0.0
    %v317 = vadd.f32 %v315, %v316
    %v318 = vrot.slane %v317, 4
    %v319 = vadd.f32 %v317, %v318
    %v320 = vrot.slane %v319, 2
    %v321 = vadd.f32 %v319, %v320
    %v322 = vrot.slane %v321, 1
    %v323 = vadd.f32 %v321, %v322
    %v324 = vmul.f32 %v270, 0.0078125
    %v325 = vmul.f32 %v323, 0.0078125
    %v326 = vmul.f32 %v324, %v324
    %v327 = vsub.f32 %v325, %v326
    %v328 = vadd.f32 %v327, 1e-05
    %v329 = vrsqrt.pop %v328
    %v330 = vmul.f32 %v33, %v329
    %v331 = vmul.f32 %v324, %v330
    %v332 = vsub.f32 %v34, %v331
    %v333 = vlaneseq
    %v334 = vshrl.u32 %v333, 7
    %v335 = vsub.s32 0, %v334
    %v336 = vrot.slane %v330, %v335
    %v337 = vmul.f32 %v155, %v336
    %v338 = vmul.f32 %v160, %v336
    %v339 = vmul.f32 %v165, %v336
    %v340 = vmul.f32 %v170, %v336
    %v341 = vmul.f32 %v175, %v336
    %v342 = vmul.f32 %v180, %v336
    %v343 = vmul.f32 %v185, %v336
    %v344 = vmul.f32 %v190, %v336
    %v345 = vmul.f32 %v195, %v336
    %v346 = vmul.f32 %v200, %v336
    %v347 = vmul.f32 %v205, %v336
    %v348 = vmul.f32 %v210, %v336
    %v349 = vmul.f32 %v215, %v336
    %v350 = vmul.f32 %v220, %v336
    %v351 = vmul.f32 %v225, %v336
    %v352 = vmul.f32 %v230, %v336
    %v353 = vlaneseq
    %v354 = vshrl.u32 %v353, 7
    %v355 = vsub.s32 0, %v354
    %v356 = vrot.slane %v332, %v355
    %v357 = vadd.f32 %v337, %v356
    %v358 = vadd.f32 %v338, %v356
    %v359 = vadd.f32 %v339, %v356
    %v360 = vadd.f32 %v340, %v356
    %v361 = vadd.f32 %v341, %v356
    %v362 = vadd.f32 %v342, %v356
    %v363 = vadd.f32 %v343, %v356
    %v364 = vadd.f32 %v344, %v356
    %v365 = vadd.f32 %v345, %v356
    %v366 = vadd.f32 %v346, %v356
    %v367 = vadd.f32 %v347, %v356
    %v368 = vadd.f32 %v348, %v356
    %v369 = vadd.f32 %v349, %v356
    %v370 = vadd.f32 %v350, %v356
    %v371 = vadd.f32 %v351, %v356
    %v372 = vadd.f32 %v352, %v356
    %v373 = vmax.f32 %v357, 0.0
    %v374 = vmax.f32 %v358, 0.0
    %v375 = vmax.f32 %v359, 0.0
    %v376 = vmax.f32 %v360, 0.0
    %v377 = vmax.f32 %v361, 0.0
    %v378 = vmax.f32 %v362, 0.0
    %v379 = vmax.f32 %v363, 0.0
    %v380 = vmax.f32 %v364, 0.0
    %v381 = vmax.f32 %v365, 0.0
    %v382 = vmax.f32 %v366, 0.0
    %v383 = vmax.f32 %v367, 0.0
    %v384 = vmax.f32 %v368, 0.0
    %v385 = vmax.f32 %v369, 0.0
    %v386 = vmax.f32 %v370, 0.0
    %v387 = vmax.f32 %v371, 0.0
    %v388 = vmax.f32 %v372, 0.0
    %389 = vst.msk [vmem:[#allocation2] sm:$0xff] %vm233, %v373
    %390 = vst.msk [vmem:[#allocation2 + $0x8] sm:$0xff] %vm233, %v374
    %391 = vst.msk [vmem:[#allocation2 + $0x10] sm:$0xff] %vm233, %v375
    %392 = vst.msk [vmem:[#allocation2 + $0x18] sm:$0xff] %vm233, %v376
    %393 = vst.msk [vmem:[#allocation2 + $0x20] sm:$0xff] %vm233, %v377
    %394 = vst.msk [vmem:[#allocation2 + $0x28] sm:$0xff] %vm233, %v378
    %395 = vst.msk [vmem:[#allocation2 + $0x30] sm:$0xff] %vm233, %v379
    %396 = vst.msk [vmem:[#allocation2 + $0x38] sm:$0xff] %vm233, %v380
    %397 = vst.msk [vmem:[#allocation2 + $0x40] sm:$0xff] %vm233, %v381
    %398 = vst.msk [vmem:[#allocation2 + $0x48] sm:$0xff] %vm233, %v382
    %399 = vst.msk [vmem:[#allocation2 + $0x50] sm:$0xff] %vm233, %v383
    %400 = vst.msk [vmem:[#allocation2 + $0x58] sm:$0xff] %vm233, %v384
    %401 = vst.msk [vmem:[#allocation2 + $0x60] sm:$0xff] %vm233, %v385
    %402 = vst.msk [vmem:[#allocation2 + $0x68] sm:$0xff] %vm233, %v386
    %403 = vst.msk [vmem:[#allocation2 + $0x70] sm:$0xff] %vm233, %v387
    %404 = vst.msk [vmem:[#allocation2 + $0x78] sm:$0xff] %vm233, %v388
    // Predicated region
    $region14: #{mlp1a_forward.1} parent=1 // pred_check
      _
    $region15: #{mlp1a_forward.1} parent=1 // pred_check_branch
      %406 = sbr.rel (0) target = $region17
    $region16: #{mlp1a_forward.1} parent=1 // pred_region
      %s408 = ssub.s32 2048, 2048
      %409 = vsyncadd [#allocation3], %s408
      %s410 = sshll.u32 [#allocation2], 4
      %s411 = int_to_ptr.vmem [resolvable:$true] %s410
      %416 = dma.vmem_to_hbm [thread:$0]  %s411, 2048, %s3, [#allocation3], 128, 128, 8
    $region17: #{mlp1a_forward.1} parent=1 // pred_fallthru
      _
    // Predicated region
    $region18: #{mlp1a_forward.1} parent=1 // pred_check
      _
    $region19: #{mlp1a_forward.1} parent=1 // pred_check_branch
      %418 = sbr.rel (0) target = $region21
    $region20: #{mlp1a_forward.1} parent=1 // pred_region
      %419 = dma.done [#allocation3], 2048
    $region21: #{mlp1a_forward.1} parent=1 // pred_fallthru
      _
    %420 = vsyncpa [#allocation3], 1

</llo_original>
